<compile_context>
chip_gen: v6e
topology: v6e:2x2x1
jax: 0.10.0
libtpu: 0.0.40
codegen_flags: <defaults>
</compile_context>

<pallas_src>
import functools

import jax
import jax.numpy as jnp
from jax.experimental import pallas as pl
from jax.experimental.pallas import tpu as pltpu

BN_EPS = 1e-5


# ---------------------------------------------------------------------------
# Small-batch path: whole problem fits in VMEM -> one fused pallas_call.
# ---------------------------------------------------------------------------
def _fused_kernel(x_ref, w1_ref, gamma_ref, beta_ref, w2_ref, b2_ref, o_ref):
    n = x_ref.shape[0]
    # Linear 1 on the MXU (bf16 operands, f32 accumulation). b1 is dropped:
    # BN subtracts the batch mean so a constant bias row cancels exactly.
    h = jnp.dot(x_ref[...].astype(jnp.bfloat16), w1_ref[...],
                preferred_element_type=jnp.float32)

    # BatchNorm1d, training mode (biased variance), single pass over h.
    inv_n = 1.0 / n
    mean = jnp.sum(h, axis=0, keepdims=True) * inv_n
    var = jnp.maximum(jnp.sum(h * h, axis=0, keepdims=True) * inv_n - mean * mean, 0.0)
    inv_std = jax.lax.rsqrt(var + BN_EPS)
    # Fold BN affine into one [1, hidden] scale/shift.
    scale = inv_std * gamma_ref[...]
    shift = beta_ref[...] - mean * scale

    h = jnp.maximum(h * scale + shift, 0.0)                     # BN + ReLU (f32)

    y = jnp.dot(h.astype(jnp.bfloat16), w2_ref[...],
                preferred_element_type=jnp.float32)
    o_ref[...] = jnp.maximum(y + b2_ref[...], 0.0)              # Linear2 + ReLU


def _gin_aggr_fused(x, w1, gamma, beta, w2, b2):
    n = x.shape[0]
    out_dim = w2.shape[1]
    full = lambda a: pl.BlockSpec(a.shape, lambda: (0,) * a.ndim)
    return pl.pallas_call(
        _fused_kernel,
        out_shape=jax.ShapeDtypeStruct((n, out_dim), jnp.float32),
        in_specs=[full(x), full(w1), full(gamma), full(beta), full(w2), full(b2)],
        out_specs=pl.BlockSpec((n, out_dim), lambda: (0, 0)),
    )(x, w1, gamma, beta, w2, b2)


# ---------------------------------------------------------------------------
# Large-batch path: row-tiled grid, two passes (BN needs whole-batch stats).
# ---------------------------------------------------------------------------
def _lin1_stats_kernel(x_ref, w1_ref, h_ref, sum_ref, ssq_ref, *, n_rows, tile_n):
    i = pl.program_id(0)

    @pl.when(i == 0)
    def _():
        sum_ref[...] = jnp.zeros_like(sum_ref)
        ssq_ref[...] = jnp.zeros_like(ssq_ref)

    h = jnp.dot(x_ref[...].astype(jnp.bfloat16), w1_ref[...],
                preferred_element_type=jnp.float32)
    h_ref[...] = h

    if n_rows % tile_n != 0:  # mask padded rows of the edge tile out of the stats
        rows = i * tile_n + jax.lax.broadcasted_iota(jnp.int32, (tile_n, 1), 0)
        h = jnp.where(rows < n_rows, h, 0.0)

    sum_ref[...] += jnp.sum(h, axis=0, keepdims=True)
    ssq_ref[...] += jnp.sum(h * h, axis=0, keepdims=True)


def _apply_kernel(h_ref, scale_ref, shift_ref, w2_ref, b2_ref, o_ref):
    h = jnp.maximum(h_ref[...] * scale_ref[...] + shift_ref[...], 0.0)   # BN + ReLU
    y = jnp.dot(h.astype(jnp.bfloat16), w2_ref[...],
                preferred_element_type=jnp.float32)
    o_ref[...] = jnp.maximum(y + b2_ref[...], 0.0)                       # Linear2 + ReLU


def _gin_aggr_tiled(x, w1, gamma, beta, w2, b2, tile_n):
    n, in_dim = x.shape
    hidden = w1.shape[1]
    out_dim = w2.shape[1]
    num_tiles = pl.cdiv(n, tile_n)

    # Pass 1: Linear1 + global per-feature sum / sum-of-squares.
    # Stats outputs use a constant index_map (VMEM-resident accumulators), so the
    # row axis must be "arbitrary" here.
    stats_kernel = functools.partial(_lin1_stats_kernel, n_rows=n, tile_n=tile_n)
    h, s, ssq = pl.pallas_call(
        stats_kernel,
        out_shape=(
            jax.ShapeDtypeStruct((n, hidden), jnp.float32),
            jax.ShapeDtypeStruct((1, hidden), jnp.float32),
            jax.ShapeDtypeStruct((1, hidden), jnp.float32),
        ),
        grid=(num_tiles,),
        in_specs=[
            pl.BlockSpec((tile_n, in_dim), lambda i: (i, 0)),
            pl.BlockSpec((in_dim, hidden), lambda i: (0, 0)),   # weights VMEM-resident
        ],
        out_specs=(
            pl.BlockSpec((tile_n, hidden), lambda i: (i, 0)),
            pl.BlockSpec((1, hidden), lambda i: (0, 0)),
            pl.BlockSpec((1, hidden), lambda i: (0, 0)),
        ),
        compiler_params=pltpu.CompilerParams(dimension_semantics=("arbitrary",)),
    )(x, w1)

    # Tiny [1, hidden] epilogue: biased variance via E[h^2]-mean^2, fold BN affine.
    inv_n = 1.0 / n
    mean = s * inv_n
    var = jnp.maximum(ssq * inv_n - mean * mean, 0.0)
    inv_std = jax.lax.rsqrt(var + BN_EPS)
    scale = inv_std * gamma
    shift = beta - mean * scale

    # Pass 2: normalize + ReLU + Linear2 + ReLU. Independent per row tile ->
    # "parallel" so both v7x TensorCores take half the tiles.
    return pl.pallas_call(
        _apply_kernel,
        out_shape=jax.ShapeDtypeStruct((n, out_dim), jnp.float32),
        grid=(num_tiles,),
        in_specs=[
            pl.BlockSpec((tile_n, hidden), lambda i: (i, 0)),
            pl.BlockSpec((1, hidden), lambda i: (0, 0)),
            pl.BlockSpec((1, hidden), lambda i: (0, 0)),
            pl.BlockSpec((hidden, out_dim), lambda i: (0, 0)),
            pl.BlockSpec((1, out_dim), lambda i: (0, 0)),
        ],
        out_specs=pl.BlockSpec((tile_n, out_dim), lambda i: (i, 0)),
        compiler_params=pltpu.CompilerParams(dimension_semantics=("parallel",)),
    )(h, scale, shift, w2, b2)


def gin_aggr(x, w1, b1, gamma, beta, w2, b2, *, tile_n=1024):
    """GINAggr forward. `b1` is accepted for interface parity with the PyTorch
    module but unused: BatchNorm removes any constant bias added after Linear1.
    tile_n defaults to 1024 rows (fits v7x's smaller VMEM with large headroom)."""
    del b1
    gamma = gamma.reshape(1, -1).astype(jnp.float32)
    beta = beta.reshape(1, -1).astype(jnp.float32)
    b2 = b2.reshape(1, -1).astype(jnp.float32)
    # Weights live in HBM as bf16: halves weight DMA, native MXU operand dtype.
    w1 = w1.astype(jnp.bfloat16)
    w2 = w2.astype(jnp.bfloat16)
    n = x.shape[0]
    if n <= tile_n:
        return _gin_aggr_fused(x, w1, gamma, beta, w2, b2)
    return _gin_aggr_tiled(x, w1, gamma, beta, w2, b2, tile_n)


# ---------------------------------------------------------------------------
# Pure-JAX reference with exact PyTorch semantics (f32, includes b1).
# ---------------------------------------------------------------------------
def reference(x, w1, b1, gamma, beta, w2, b2):
    h = x @ w1 + b1
    mean = jnp.mean(h, axis=0, keepdims=True)
    var = jnp.mean((h - mean) ** 2, axis=0, keepdims=True)
    h = (h - mean) / jnp.sqrt(var + BN_EPS) * gamma + beta
    h = jnp.maximum(h, 0.0)
    return jnp.maximum(h @ w2 + b2, 0.0)


if __name__ == "__main__":
    IN_DIM, HIDDEN, OUT = 32, 128, 128

    key = jax.random.PRNGKey(0)
    kx, kw1, kb1, kw2, kb2 = jax.random.split(key, 5)

    # PyTorch Linear-style uniform init; BatchNorm1d gamma=1, beta=0.
    lim1 = 1.0 / jnp.sqrt(IN_DIM)
    lim2 = 1.0 / jnp.sqrt(HIDDEN)
    w1 = jax.random.uniform(kw1, (IN_DIM, HIDDEN), minval=-lim1, maxval=lim1, dtype=jnp.float32)
    b1 = jax.random.uniform(kb1, (HIDDEN,), minval=-lim1, maxval=lim1, dtype=jnp.float32)
    gamma = jnp.ones((HIDDEN,), jnp.float32)
    beta = jnp.zeros((HIDDEN,), jnp.float32)
    w2 = jax.random.uniform(kw2, (HIDDEN, OUT), minval=-lim2, maxval=lim2, dtype=jnp.float32)
    b2 = jax.random.uniform(kb2, (OUT,), minval=-lim2, maxval=lim2, dtype=jnp.float32)

    # (N=512, tile=128) exercises the row-tiled two-pass path (4 grid steps per pass);
    # (N=8) exercises the single fully-fused small-batch path.
    for n_rows, tile_n in ((512, 128), (8, 1024)):
        x = jax.random.normal(jax.random.fold_in(kx, n_rows), (n_rows, IN_DIM), dtype=jnp.float32)
        out = jax.block_until_ready(gin_aggr(x, w1, b1, gamma, beta, w2, b2, tile_n=tile_n))
        ref = reference(x, w1, b1, gamma, beta, w2, b2)
        assert out.shape == (n_rows, OUT)
        # Tolerance covers bf16 MXU operands (f32 accumulation keeps it small).
        assert jnp.allclose(out, ref, atol=5e-2, rtol=5e-2), (
            f"mismatch vs reference at N={n_rows}: max|diff|={jnp.max(jnp.abs(out - ref))}")
        assert bool(jnp.all(jnp.isfinite(out)))

    print("KERNEL_OK")
</pallas_src>

<mosaic_0001>
module attributes {stable_mosaic.version = 11 : i64} {
  func.func @_lin1_stats_kernel(%arg0: i32, %arg1: memref<128x32xf32, #tpu.memory_space<vmem>>, %arg2: memref<32x128xbf16, #tpu.memory_space<vmem>>, %arg3: memref<128x128xf32, #tpu.memory_space<vmem>>, %arg4: memref<1x128xf32, #tpu.memory_space<vmem>>, %arg5: memref<1x128xf32, #tpu.memory_space<vmem>>) attributes {dimension_semantics = [#tpu.dimension_semantics<arbitrary>], iteration_bounds = array<i64: 4>, scalar_prefetch = 0 : i64, scratch_operands = 0 : i64, tpu.core_type = #tpu.core_type<tc>, window_params = [{transform_indices = @transform_0, window_bounds = array<i64: 128, 32>}, {pipeline_mode = #tpu.pipeline_mode<synchronous>, transform_indices = @transform_1, window_bounds = array<i64: 32, 128>}, {transform_indices = @transform_2, window_bounds = array<i64: 128, 128>}, {pipeline_mode = #tpu.pipeline_mode<synchronous>, transform_indices = @transform_3, window_bounds = array<i64: 1, 128>}, {pipeline_mode = #tpu.pipeline_mode<synchronous>, transform_indices = @transform_4, window_bounds = array<i64: 1, 128>}]} {
    %c0_i32 = arith.constant 0 : i32
    %0 = arith.cmpi eq, %arg0, %c0_i32 : i32
    %1 = arith.extui %0 : i1 to i32
    %c0_i32_0 = arith.constant 0 : i32
    %2 = arith.cmpi ne, %1, %c0_i32_0 : i32
    scf.if %2 {
      %cst_16 = arith.constant 0.000000e+00 : f32
      %19 = vector.broadcast %cst_16 : f32 to vector<1x128xf32>
      %c0_17 = arith.constant 0 : index
      %c0_18 = arith.constant 0 : index
      %20 = vector.load %arg4[%c0_17, %c0_18] : memref<1x128xf32, #tpu.memory_space<vmem>>, vector<1x128xf32>
      tpu.vector_store %arg4[%c0_17, %c0_18], %19 {strides = array<i32>} : memref<1x128xf32, #tpu.memory_space<vmem>>, vector<1x128xf32>,
      %cst_19 = arith.constant 0.000000e+00 : f32
      %21 = vector.broadcast %cst_19 : f32 to vector<1x128xf32>
      %c0_20 = arith.constant 0 : index
      %c0_21 = arith.constant 0 : index
      %22 = vector.load %arg5[%c0_20, %c0_21] : memref<1x128xf32, #tpu.memory_space<vmem>>, vector<1x128xf32>
      tpu.vector_store %arg5[%c0_20, %c0_21], %21 {strides = array<i32>} : memref<1x128xf32, #tpu.memory_space<vmem>>, vector<1x128xf32>,
    } else {
    }
    %c0 = arith.constant 0 : index
    %c0_1 = arith.constant 0 : index
    %3 = vector.load %arg1[%c0, %c0_1] : memref<128x32xf32, #tpu.memory_space<vmem>>, vector<128x32xf32>
    %4 = arith.truncf %3 : vector<128x32xf32> to vector<128x32xbf16>
    %c0_2 = arith.constant 0 : index
    %c0_3 = arith.constant 0 : index
    %5 = vector.load %arg2[%c0_2, %c0_3] : memref<32x128xbf16, #tpu.memory_space<vmem>>, vector<32x128xbf16>
    %cst = arith.constant dense<0.000000e+00> : vector<128x128xf32>
    %6 = tpu.matmul %4, %5, %cst {dimension_numbers = #tpu.dot_dimension_numbers<[1], [0], [0], [1], [0, 0, 1, 1], [], []>} : vector<128x32xbf16>, vector<32x128xbf16>, vector<128x128xf32> -> vector<128x128xf32>
    %c0_4 = arith.constant 0 : index
    %c0_5 = arith.constant 0 : index
    %7 = vector.load %arg3[%c0_4, %c0_5] : memref<128x128xf32, #tpu.memory_space<vmem>>, vector<128x128xf32>
    tpu.vector_store %arg3[%c0_4, %c0_5], %6 {strides = array<i32>} : memref<128x128xf32, #tpu.memory_space<vmem>>, vector<128x128xf32>,
    %c0_6 = arith.constant 0 : index
    %c0_7 = arith.constant 0 : index
    %8 = vector.load %arg4[%c0_6, %c0_7] : memref<1x128xf32, #tpu.memory_space<vmem>>, vector<1x128xf32>
    %cst_8 = arith.constant dense<0.000000e+00> : vector<128xf32>
    %9 = vector.multi_reduction <add>, %6, %cst_8 [0] : vector<128x128xf32> to vector<128xf32>
    %10 = vector.shape_cast %9 : vector<128xf32> to vector<1x128xf32>
    %11 = arith.addf %8, %10 : vector<1x128xf32>
    %c0_9 = arith.constant 0 : index
    %c0_10 = arith.constant 0 : index
    %12 = vector.load %arg4[%c0_9, %c0_10] : memref<1x128xf32, #tpu.memory_space<vmem>>, vector<1x128xf32>
    tpu.vector_store %arg4[%c0_9, %c0_10], %11 {strides = array<i32>} : memref<1x128xf32, #tpu.memory_space<vmem>>, vector<1x128xf32>,
    %c0_11 = arith.constant 0 : index
    %c0_12 = arith.constant 0 : index
    %13 = vector.load %arg5[%c0_11, %c0_12] : memref<1x128xf32, #tpu.memory_space<vmem>>, vector<1x128xf32>
    %14 = arith.mulf %6, %6 : vector<128x128xf32>
    %cst_13 = arith.constant dense<0.000000e+00> : vector<128xf32>
    %15 = vector.multi_reduction <add>, %14, %cst_13 [0] : vector<128x128xf32> to vector<128xf32>
    %16 = vector.shape_cast %15 : vector<128xf32> to vector<1x128xf32>
    %17 = arith.addf %13, %16 : vector<1x128xf32>
    %c0_14 = arith.constant 0 : index
    %c0_15 = arith.constant 0 : index
    %18 = vector.load %arg5[%c0_14, %c0_15] : memref<1x128xf32, #tpu.memory_space<vmem>>, vector<1x128xf32>
    tpu.vector_store %arg5[%c0_14, %c0_15], %17 {strides = array<i32>} : memref<1x128xf32, #tpu.memory_space<vmem>>, vector<1x128xf32>,
    return
  }
  func.func @transform_0(%arg0: i32) -> (i32, i32) {
    %c0_i32 = arith.constant 0 : i32
    %c0_i32_0 = arith.constant 0 : i32
    return %arg0, %c0_i32 : i32, i32
  }
  func.func @transform_1(%arg0: i32) -> (i32, i32) {
    %c0_i32 = arith.constant 0 : i32
    %c0_i32_0 = arith.constant 0 : i32
    %c0_i32_1 = arith.constant 0 : i32
    return %c0_i32, %c0_i32_0 : i32, i32
  }
  func.func @transform_2(%arg0: i32) -> (i32, i32) {
    %c0_i32 = arith.constant 0 : i32
    %c0_i32_0 = arith.constant 0 : i32
    return %arg0, %c0_i32 : i32, i32
  }
  func.func @transform_3(%arg0: i32) -> (i32, i32) {
    %c0_i32 = arith.constant 0 : i32
    %c0_i32_0 = arith.constant 0 : i32
    %c0_i32_1 = arith.constant 0 : i32
    return %c0_i32, %c0_i32_0 : i32, i32
  }
  func.func @transform_4(%arg0: i32) -> (i32, i32) {
    %c0_i32 = arith.constant 0 : i32
    %c0_i32_0 = arith.constant 0 : i32
    %c0_i32_1 = arith.constant 0 : i32
    return %c0_i32, %c0_i32_0 : i32, i32
  }
}

</mosaic_0001>

<llo_original>
// kernel: tpu_custom_call.1
$region0: #{tpu_custom_call.1}
  #allocation0 [shape = 'u32[]', space=smem, size = 0x4, offset = 0x4, fixed_abs, tag = 'smem constant byte address 0x4 - core index']
  #allocation1 [shape = 'u32[144,128]{1,0:T(1,128)}', space=vmem, size = 0x12000, scoped, tag = 'internal scratch']
  %s0 = inlined_call_operand.vmem [shape: f32[512,32], index: 0, kind: input, shape index: {}]
  %s1 = inlined_call_operand.vmem [shape: bf16[32,128], index: 1, kind: input, shape index: {}]
  %s2 = inlined_call_operand.hbm [shape: f32[512,128], index: 2, kind: output, shape index: {0}]
  %s3 = inlined_call_operand.hbm [shape: f32[1,128], index: 3, kind: output, shape index: {1}]
  %s4 = inlined_call_operand.hbm [shape: f32[1,128], index: 4, kind: output, shape index: {2}]
  %5 = xla_tuple %s2, %s3, %s4
  %s6 = sld [smem:[#allocation0]]
  $region61: #{tpu_custom_call.1} parent=0
    _
  %s8 = ssub.s32 1, %s6
  %s9 = scalar_select 0, %s8, %s6
  $region1: #{tpu_custom_call.1} parent=0
    #allocation2 [shape = 'u8[131072]{0}', space=vmem, size = 0x20000, scoped, tag = 'output window, operand 0']
    #allocation3 [shape = 's32[2]{0}', space=sflag, size = 0x8, scoped, tag = 'scoped memory for tpu_custom_call.1']
    #allocation4 [shape = 'u8[512]{0}', space=vmem, size = 0x400, scoped, tag = 'output window, operand 1, single buffered']
    #allocation5 [shape = 's32[1]{0}', space=sflag, size = 0x4, scoped, tag = 'scoped memory for tpu_custom_call.1']
    #allocation6 [shape = 'u8[512]{0}', space=vmem, size = 0x400, scoped, tag = 'output window, operand 2, single buffered']
    %10 = vsyncpa [#allocation3], 0
    %s11 = scalar_lea.sflag [#allocation3], 1
    %12 = vsyncpa %s11, 0
    %13 = vsyncpa [#allocation5], 0
    loop: start=0, step=1, limit=6
    $region2: #{tpu_custom_call.1} parent=1 // loop_pre_header
      _
    $region3: #{tpu_custom_call.1} parent=1 // loop_header
      %s15 = sphi 0, %s19
      %p16 = scmp.ge.s32.totalorder %s15, 6
      %s25 = sphi 0, %s27
      %s28 = sphi 0, %s25
      %s29 = sphi 0, %s28
      %s45 = sphi 0, %s29
      %s49 = sphi 0, %s49
      %s51 = sphi 0, %s49
      %s52 = sphi 0, %s51
      %s66 = sphi 0, %s52
      %s72 = sphi 0, %s74
      %s75 = sphi 0, %s72
      %s76 = sphi 0, %s75
      %s92 = sphi 0, %s76
      %s96 = sphi 0, %s96
      %s98 = sphi 0, %s96
      %s99 = sphi 0, %s98
      %s113 = sphi 0, %s99
      %s117 = sphi 0, %s117
      %s119 = sphi 0, %s117
      %s120 = sphi 0, %s119
      %s134 = sphi 0, %s120
    $region4: #{tpu_custom_call.1} parent=1 // loop_header_branch
      %18 = sbr.rel (%p16) target = $region8
    $region5: #{tpu_custom_call.1} parent=1 // loop_body
      %s20 = ssub.s32 %s15, 1
      %s21 = ssub.s32 %s15, 2
      %s22 = sadd.s32 %s15, 1
      %s23 = ssub.s32 %s15, %s22
      %p24 = scmp.eq.s32.totalorder %s23, 0
      %s26 = sadd.s32 %s25, 1
      %s27 = scalar_select %p24, %s25, %s26
      %p30 = pneg %p24
      %p31 = scmp.eq.s32.totalorder %s15, 3
      %p32 = por %p30, %p31
      %p33 = scmp.ne.s32.totalorder %s25, %s28
      %p34 = scmp.eq.s32.totalorder %s15, 0
      %p35 = por %p33, %p34
      %p36 = scmp.ne.s32.totalorder %s25, %s28
      %p37 = scmp.eq.s32.totalorder %s20, 3
      %p38 = por %p36, %p37
      %p39 = scmp.ne.s32.totalorder %s28, %s29
      %p40 = scmp.eq.s32.totalorder %s20, 0
      %p41 = por %p39, %p40
      %p42 = scmp.ne.s32.totalorder %s28, %s29
      %p43 = scmp.eq.s32.totalorder %s21, 3
      %p44 = por %p42, %p43
      %p46 = scmp.ne.s32.totalorder %s29, %s45
      %p47 = scmp.eq.s32.totalorder %s21, 0
      %p48 = por %p46, %p47
      %s50 = sadd.s32 %s49, 1
      %p53 = scmp.eq.s32.totalorder %s15, 3
      %p54 = scmp.ne.s32.totalorder %s49, %s51
      %p55 = scmp.eq.s32.totalorder %s15, 0
      %p56 = por %p54, %p55
      %p57 = scmp.ne.s32.totalorder %s49, %s51
      %p58 = scmp.eq.s32.totalorder %s20, 3
      %p59 = por %p57, %p58
      %p60 = scmp.ne.s32.totalorder %s51, %s52
      %p61 = scmp.eq.s32.totalorder %s20, 0
      %p62 = por %p60, %p61
      %p63 = scmp.ne.s32.totalorder %s51, %s52
      %p64 = scmp.eq.s32.totalorder %s21, 3
      %p65 = por %p63, %p64
      %p67 = scmp.ne.s32.totalorder %s52, %s66
      %p68 = scmp.eq.s32.totalorder %s21, 0
      %p69 = por %p67, %p68
      %s70 = ssub.s32 %s15, %s22
      %p71 = scmp.eq.s32.totalorder %s70, 0
      %s73 = sadd.s32 %s72, 1
      %s74 = scalar_select %p71, %s72, %s73
      %p77 = pneg %p71
      %p78 = scmp.eq.s32.totalorder %s15, 3
      %p79 = por %p77, %p78
      %p80 = scmp.ne.s32.totalorder %s72, %s75
      %p81 = scmp.eq.s32.totalorder %s15, 0
      %p82 = por %p80, %p81
      %p83 = scmp.ne.s32.totalorder %s72, %s75
      %p84 = scmp.eq.s32.totalorder %s20, 3
      %p85 = por %p83, %p84
      %p86 = scmp.ne.s32.totalorder %s75, %s76
      %p87 = scmp.eq.s32.totalorder %s20, 0
      %p88 = por %p86, %p87
      %p89 = scmp.ne.s32.totalorder %s75, %s76
      %p90 = scmp.eq.s32.totalorder %s21, 3
      %p91 = por %p89, %p90
      %p93 = scmp.ne.s32.totalorder %s76, %s92
      %p94 = scmp.eq.s32.totalorder %s21, 0
      %p95 = por %p93, %p94
      %s97 = sadd.s32 %s96, 1
      %p100 = scmp.eq.s32.totalorder %s15, 3
      %p101 = scmp.ne.s32.totalorder %s96, %s98
      %p102 = scmp.eq.s32.totalorder %s15, 0
      %p103 = por %p101, %p102
      %p104 = scmp.ne.s32.totalorder %s96, %s98
      %p105 = scmp.eq.s32.totalorder %s20, 3
      %p106 = por %p104, %p105
      %p107 = scmp.ne.s32.totalorder %s98, %s99
      %p108 = scmp.eq.s32.totalorder %s20, 0
      %p109 = por %p107, %p108
      %p110 = scmp.ne.s32.totalorder %s98, %s99
      %p111 = scmp.eq.s32.totalorder %s21, 3
      %p112 = por %p110, %p111
      %p114 = scmp.ne.s32.totalorder %s99, %s113
      %p115 = scmp.eq.s32.totalorder %s21, 0
      %p116 = por %p114, %p115
      %s118 = sadd.s32 %s117, 1
      %p121 = scmp.eq.s32.totalorder %s15, 3
      %p122 = scmp.ne.s32.totalorder %s117, %s119
      %p123 = scmp.eq.s32.totalorder %s15, 0
      %p124 = por %p122, %p123
      %p125 = scmp.ne.s32.totalorder %s117, %s119
      %p126 = scmp.eq.s32.totalorder %s20, 3
      %p127 = por %p125, %p126
      %p128 = scmp.ne.s32.totalorder %s119, %s120
      %p129 = scmp.eq.s32.totalorder %s20, 0
      %p130 = por %p128, %p129
      %p131 = scmp.ne.s32.totalorder %s119, %s120
      %p132 = scmp.eq.s32.totalorder %s21, 3
      %p133 = por %p131, %p132
      %p135 = scmp.ne.s32.totalorder %s120, %s134
      %p136 = scmp.eq.s32.totalorder %s21, 0
      %p137 = por %p135, %p136
      %p138 = scmp.le.s32.totalorder 1, %s15
      %p139 = scmp.lt.s32.totalorder %s15, 5
      %p140 = pnand %p138, %p139
      %p141 = pneg %p140
      // Predicated region
      $region9: #{tpu_custom_call.1} parent=5 // pred_check
        _
      $region10: #{tpu_custom_call.1} parent=5 // pred_check_branch
        %143 = sbr.rel (%p140) target = $region12
      $region11: #{tpu_custom_call.1} parent=5 // pred_region
        %s144 = ssub.s32 %s15, 1
        // Predicated region
        $region13: #{tpu_custom_call.1} parent=11 // pred_check
          %p145 = pneg %p62
        $region14: #{tpu_custom_call.1} parent=11 // pred_check_branch
          %147 = sbr.rel (%p145) target = $region16
        $region15: #{tpu_custom_call.1} parent=11 // pred_region
          _
        $region16: #{tpu_custom_call.1} parent=11 // pred_fallthru
          _
      $region12: #{tpu_custom_call.1} parent=5 // pred_fallthru
        _
      %p148 = scmp.lt.s32.totalorder %s15, 4
      // Predicated region
      $region17: #{tpu_custom_call.1} parent=5 // pred_check
        %p149 = pneg %p148
      $region18: #{tpu_custom_call.1} parent=5 // pred_check_branch
        %151 = sbr.rel (%p149) target = $region20
      $region19: #{tpu_custom_call.1} parent=5 // pred_region
        // Predicated region
        $region21: #{tpu_custom_call.1} parent=19 // pred_check
          %p152 = pneg %p35
        $region22: #{tpu_custom_call.1} parent=19 // pred_check_branch
          %154 = sbr.rel (%p152) target = $region24
        $region23: #{tpu_custom_call.1} parent=19 // pred_region
          %s155 = smul.u32 16, %s15
          %p156 = scmp.lt.s32.totalorder %s155, 63
          %s157 = scalar_select %p156, %s155, 63
          %s158 = smul.addr %s157, 8
          %s159 = scalar_lea.vmem %s0, %s158
          %s160 = smul.u32 16, %s15
        $region24: #{tpu_custom_call.1} parent=19 // pred_fallthru
          _
      $region20: #{tpu_custom_call.1} parent=5 // pred_fallthru
        _
      %p161 = scmp.le.s32.totalorder 1, %s15
      %p162 = scmp.lt.s32.totalorder %s15, 5
      %p163 = pnand %p161, %p162
      %p164 = pneg %p163
      // Predicated region
      $region25: #{tpu_custom_call.1} parent=5 // pred_check
        _
      $region26: #{tpu_custom_call.1} parent=5 // pred_check_branch
        %166 = sbr.rel (%p163) target = $region28
      $region27: #{tpu_custom_call.1} parent=5 // pred_region
        %s167 = ssub.s32 %s15, 1
        %s168 = smul.u32 16, %s20
        %p169 = scmp.lt.s32.totalorder %s168, 63
        %s170 = scalar_select %p169, %s168, 63
        %s171 = smul.addr %s170, 8
        %s172 = scalar_lea.vmem %s0, %s171
        %p173 = pneg %p41
        %p174 = pneg %p38
        %p175 = pneg %p62
        %p176 = pneg %p59
        %p177 = pneg %p88
        %p178 = pneg %p85
        %s179 = sand.u32 %s75, 1
        %s180 = scalar_lea.sflag [#allocation3], %s179
        %s181 = sand.u32 %s75, 1
        %s182 = smul.addr %s181, 128
        %s183 = scalar_lea.vmem [#allocation2], %s182
        %p184 = pneg %p109
        %p185 = pneg %p106
        %p186 = pneg %p130
        %p187 = pneg %p127
        %s188 = smul.u32 16, %s20
        %p189 = scmp.lt.s32.totalorder %s188, 63
        %s190 = scalar_select %p189, %s188, 63
        %s191 = smul.addr %s190, 8
        %s192 = scalar_lea.vmem %s0, %s191
        %s193 = smul.u32 16, %s20
        %s194 = smul.u32 16, %s20
        %p196 = scmp.eq.s32.totalorder %s20, 0
        // Predicated region
        $region29: #{tpu_custom_call.1} parent=27 // pred_check
          %p197 = pneg %p196
        $region30: #{tpu_custom_call.1} parent=27 // pred_check_branch
          %199 = sbr.rel (%p197) target = $region32
        $region31: #{tpu_custom_call.1} parent=27 // pred_region
          %200 = vst [vmem:[#allocation4] sm:$0x1] 0.0
          %201 = vst [vmem:[#allocation6] sm:$0x1] 0.0
        $region32: #{tpu_custom_call.1} parent=27 // pred_fallthru
          _
        %v202 = vld [vmem:[%s192] sm:$0xff]
        %v203 = vld [vmem:[%s192 + $0x8] sm:$0xff]
        %v204 = vld [vmem:[%s192 + $0x10] sm:$0xff]
        %v205 = vld [vmem:[%s192 + $0x18] sm:$0xff]
        %v206 = vld [vmem:[%s192 + $0x20] sm:$0xff]
        %v207 = vld [vmem:[%s192 + $0x28] sm:$0xff]
        %v208 = vld [vmem:[%s192 + $0x30] sm:$0xff]
        %v209 = vld [vmem:[%s192 + $0x38] sm:$0xff]
        %v210 = vld [vmem:[%s192 + $0x40] sm:$0xff]
        %v211 = vld [vmem:[%s192 + $0x48] sm:$0xff]
        %v212 = vld [vmem:[%s192 + $0x50] sm:$0xff]
        %v213 = vld [vmem:[%s192 + $0x58] sm:$0xff]
        %v214 = vld [vmem:[%s192 + $0x60] sm:$0xff]
        %v215 = vld [vmem:[%s192 + $0x68] sm:$0xff]
        %v216 = vld [vmem:[%s192 + $0x70] sm:$0xff]
        %v217 = vld [vmem:[%s192 + $0x78] sm:$0xff]
        %v218 = vpack.c.bf16 %v203, %v202
        %v219 = vpack.c.bf16 %v205, %v204
        %v220 = vpack.c.bf16 %v207, %v206
        %v221 = vpack.c.bf16 %v209, %v208
        %v222 = vpack.c.bf16 %v211, %v210
        %v223 = vpack.c.bf16 %v213, %v212
        %v224 = vpack.c.bf16 %v215, %v214
        %v225 = vpack.c.bf16 %v217, %v216
        %v226 = vld [vmem:[%s1] sm:$0xf]
        %v227 = vld [vmem:[%s1 + $0x4] sm:$0xf]
        %v228 = vld [vmem:[%s1 + $0x8] sm:$0xf]
        %v229 = vld [vmem:[%s1 + $0xc] sm:$0xf]
        %v234 = vunpack.c.l.b16 %v226
        %v235 = vunpack.c.l.b16 %v227
        %v236 = vunpack.c.l.b16 %v228
        %v237 = vunpack.c.l.b16 %v229
        %v238 = vpack.c.b16 %v235, %v234
        %v239 = vpack.c.b16 %v237, %v236
        %vm242 = vcmask 261120
        %v244 = vsel %vm242, %v218, 0
        %v247 = vsel %vm242, %v219, 0
        %v250 = vsel %vm242, %v220, 0
        %v253 = vsel %vm242, %v221, 0
        %v256 = vsel %vm242, %v222, 0
        %v259 = vsel %vm242, %v223, 0
        %v262 = vsel %vm242, %v224, 0
        %v265 = vsel %vm242, %v225, 0
        %267 = vmatprep.subr.bf16.mxu0 0
        %268 = vmatpush1.bf16.msra.mxu0 0
        %269 = vmatprep.subr.bf16.mxu0 0
        %270 = vmatpush1.bf16.msra.mxu0 0
        %271 = vmatprep.subr.bf16.mxu0 0
        %272 = vmatpush1.bf16.msra.mxu0 0
        %273 = vmatprep.subr.bf16.mxu0 0
        %274 = vmatpush1.bf16.msra.mxu0 0
        %275 = vmatprep.subr.bf16.mxu0 0
        %276 = vmatpush1.bf16.msra.mxu0 0
        %277 = vmatprep.subr.bf16.mxu0 0
        %278 = vmatpush1.bf16.msra.mxu0 0
        %279 = vmatprep.subr.bf16.mxu0 0
        %280 = vmatpush1.bf16.msra.mxu0 %v239
        %281 = vmatprep.subr.bf16.mxu0 0
        %282 = vmatpush1.bf16.msra.mxu0 %v238
        %283 = vmatprep.subr.bf16.mxu0 0
        %284 = vmatpush2.bf16.msra.mxu0 0
        %285 = vmatprep.subr.bf16.mxu0 0
        %286 = vmatpush2.bf16.msra.mxu0 0
        %287 = vmatprep.subr.bf16.mxu0 0
        %288 = vmatpush2.bf16.msra.mxu0 0
        %289 = vmatprep.subr.bf16.mxu0 0
        %290 = vmatpush2.bf16.msra.mxu0 0
        %291 = vmatprep.subr.bf16.mxu0 0
        %292 = vmatpush2.bf16.msra.mxu0 0
        %293 = vmatprep.subr.bf16.mxu0 0
        %294 = vmatpush2.bf16.msra.mxu0 0
        %295 = vmatprep.subr.bf16.mxu0 0
        %296 = vmatpush2.bf16.msra.mxu0 0
        %297 = vmatprep.subr.bf16.mxu0 0
        %298 = vmatpush2.bf16.msra.mxu0 0
        %299 = vmatprep.mubr.bf16.mxu0 0
        %300 = vmatmul.mubr.bf16.gmra.mxu0 %v244
        %v301 = vpop.f32.mrf.mxu0
        %v302 = vadd.f32 0.0, %v301
        %v303 = vpop.f32.mrf.mxu0
        %v304 = vpop.f32.mrf.mxu0
        %v305 = vadd.f32 0.0, %v304
        %v306 = vpop.f32.mrf.mxu0
        %307 = vmatprep.mubr.bf16.mxu0 0
        %308 = vmatmul.mubr.bf16.gmra.mxu0 %v247
        %v309 = vpop.f32.mrf.mxu0
        %v310 = vadd.f32 0.0, %v309
        %v311 = vpop.f32.mrf.mxu0
        %v312 = vpop.f32.mrf.mxu0
        %v313 = vadd.f32 0.0, %v312
        %v314 = vpop.f32.mrf.mxu0
        %315 = vmatprep.mubr.bf16.mxu0 0
        %316 = vmatmul.mubr.bf16.gmra.mxu0 %v250
        %v317 = vpop.f32.mrf.mxu0
        %v318 = vadd.f32 0.0, %v317
        %v319 = vpop.f32.mrf.mxu0
        %v320 = vpop.f32.mrf.mxu0
        %v321 = vadd.f32 0.0, %v320
        %v322 = vpop.f32.mrf.mxu0
        %323 = vmatprep.mubr.bf16.mxu0 0
        %324 = vmatmul.mubr.bf16.gmra.mxu0 %v253
        %v325 = vpop.f32.mrf.mxu0
        %v326 = vadd.f32 0.0, %v325
        %v327 = vpop.f32.mrf.mxu0
        %v328 = vpop.f32.mrf.mxu0
        %v329 = vadd.f32 0.0, %v328
        %v330 = vpop.f32.mrf.mxu0
        %331 = vmatprep.mubr.bf16.mxu0 0
        %332 = vmatmul.mubr.bf16.gmra.mxu0 %v256
        %v333 = vpop.f32.mrf.mxu0
        %v334 = vadd.f32 0.0, %v333
        %v335 = vpop.f32.mrf.mxu0
        %v336 = vpop.f32.mrf.mxu0
        %v337 = vadd.f32 0.0, %v336
        %v338 = vpop.f32.mrf.mxu0
        %339 = vmatprep.mubr.bf16.mxu0 0
        %340 = vmatmul.mubr.bf16.gmra.mxu0 %v259
        %v341 = vpop.f32.mrf.mxu0
        %v342 = vadd.f32 0.0, %v341
        %v343 = vpop.f32.mrf.mxu0
        %v344 = vpop.f32.mrf.mxu0
        %v345 = vadd.f32 0.0, %v344
        %v346 = vpop.f32.mrf.mxu0
        %347 = vmatprep.mubr.bf16.mxu0 0
        %348 = vmatmul.mubr.bf16.gmra.mxu0 %v262
        %v349 = vpop.f32.mrf.mxu0
        %v350 = vadd.f32 0.0, %v349
        %v351 = vpop.f32.mrf.mxu0
        %v352 = vpop.f32.mrf.mxu0
        %v353 = vadd.f32 0.0, %v352
        %v354 = vpop.f32.mrf.mxu0
        %355 = vmatprep.mubr.bf16.mxu0 0
        %356 = vmatmul.mubr.bf16.gmra.mxu0 %v265
        %v357 = vpop.f32.mrf.mxu0
        %v358 = vadd.f32 0.0, %v357
        %v359 = vpop.f32.mrf.mxu0
        %v360 = vpop.f32.mrf.mxu0
        %v361 = vadd.f32 0.0, %v360
        %v362 = vpop.f32.mrf.mxu0
        %363 = vdwg.mxu0
        %364 = vst [vmem:[%s183] sm:$0xff] %v302
        %365 = vst [vmem:[%s183 + $0x8] sm:$0xff] %v305
        %366 = vst [vmem:[%s183 + $0x10] sm:$0xff] %v310
        %367 = vst [vmem:[%s183 + $0x18] sm:$0xff] %v313
        %368 = vst [vmem:[%s183 + $0x20] sm:$0xff] %v318
        %369 = vst [vmem:[%s183 + $0x28] sm:$0xff] %v321
        %370 = vst [vmem:[%s183 + $0x30] sm:$0xff] %v326
        %371 = vst [vmem:[%s183 + $0x38] sm:$0xff] %v329
        %372 = vst [vmem:[%s183 + $0x40] sm:$0xff] %v334
        %373 = vst [vmem:[%s183 + $0x48] sm:$0xff] %v337
        %374 = vst [vmem:[%s183 + $0x50] sm:$0xff] %v342
        %375 = vst [vmem:[%s183 + $0x58] sm:$0xff] %v345
        %376 = vst [vmem:[%s183 + $0x60] sm:$0xff] %v350
        %377 = vst [vmem:[%s183 + $0x68] sm:$0xff] %v353
        %378 = vst [vmem:[%s183 + $0x70] sm:$0xff] %v358
        %379 = vst [vmem:[%s183 + $0x78] sm:$0xff] %v361
        %v380 = vld [vmem:[#allocation4] sm:$0x1]
        %v381 = vadd.f32 %v302, %v305
        %v382 = vadd.f32 %v381, %v310
        %v383 = vadd.f32 %v382, %v313
        %v384 = vadd.f32 %v383, %v318
        %v385 = vadd.f32 %v384, %v321
        %v386 = vadd.f32 %v385, %v326
        %v387 = vadd.f32 %v386, %v329
        %v388 = vadd.f32 %v387, %v334
        %v389 = vadd.f32 %v388, %v337
        %v390 = vadd.f32 %v389, %v342
        %v391 = vadd.f32 %v390, %v345
        %v392 = vadd.f32 %v391, %v350
        %v393 = vadd.f32 %v392, %v353
        %v394 = vadd.f32 %v393, %v358
        %v395 = vadd.f32 %v394, %v361
        %v396 = vrot.slane %v395, 4
        %v397 = vadd.f32 %v395, %v396
        %v398 = vrot.slane %v397, 2
        %v399 = vadd.f32 %v397, %v398
        %v400 = vrot.slane %v399, 1
        %v401 = vadd.f32 %v399, %v400
        %v402 = vadd.f32 %v380, %v401
        %403 = vst [vmem:[#allocation4] sm:$0x1] %v402
        %v404 = vld [vmem:[#allocation6] sm:$0x1]
        %v405 = vmul.f32 %v302, %v302
        %v406 = vmul.f32 %v305, %v305
        %v407 = vmul.f32 %v310, %v310
        %v408 = vmul.f32 %v313, %v313
        %v409 = vmul.f32 %v318, %v318
        %v410 = vmul.f32 %v321, %v321
        %v411 = vmul.f32 %v326, %v326
        %v412 = vmul.f32 %v329, %v329
        %v413 = vmul.f32 %v334, %v334
        %v414 = vmul.f32 %v337, %v337
        %v415 = vmul.f32 %v342, %v342
        %v416 = vmul.f32 %v345, %v345
        %v417 = vmul.f32 %v350, %v350
        %v418 = vmul.f32 %v353, %v353
        %v419 = vmul.f32 %v358, %v358
        %v420 = vmul.f32 %v361, %v361
        %v421 = vadd.f32 %v405, %v406
        %v422 = vadd.f32 %v421, %v407
        %v423 = vadd.f32 %v422, %v408
        %v424 = vadd.f32 %v423, %v409
        %v425 = vadd.f32 %v424, %v410
        %v426 = vadd.f32 %v425, %v411
        %v427 = vadd.f32 %v426, %v412
        %v428 = vadd.f32 %v427, %v413
        %v429 = vadd.f32 %v428, %v414
        %v430 = vadd.f32 %v429, %v415
        %v431 = vadd.f32 %v430, %v416
        %v432 = vadd.f32 %v431, %v417
        %v433 = vadd.f32 %v432, %v418
        %v434 = vadd.f32 %v433, %v419
        %v435 = vadd.f32 %v434, %v420
        %v436 = vrot.slane %v435, 4
        %v437 = vadd.f32 %v435, %v436
        %v438 = vrot.slane %v437, 2
        %v439 = vadd.f32 %v437, %v438
        %v440 = vrot.slane %v439, 1
        %v441 = vadd.f32 %v439, %v440
        %v442 = vadd.f32 %v404, %v441
        %443 = vst [vmem:[#allocation6] sm:$0x1] %v442
        %s444 = sand.u32 %s75, 1
        %s445 = scalar_lea.sflag [#allocation3], %s444
        %s446 = sand.u32 %s75, 1
        %s447 = smul.addr %s446, 128
        %s448 = scalar_lea.vmem [#allocation2], %s447
        // Predicated region
        $region33: #{tpu_custom_call.1} parent=27 // pred_check
          %p449 = pneg %p85
        $region34: #{tpu_custom_call.1} parent=27 // pred_check_branch
          %451 = sbr.rel (%p449) target = $region36
        $region35: #{tpu_custom_call.1} parent=27 // pred_region
          %s452 = smul.u32 16, %s20
          %s454 = ssub.s32 2048, 2048
          %455 = vsyncadd %s445, %s454
          %s456 = smul.addr %s452, 128
          %s457 = scalar_lea.hbm %s2, %s456
          %s458 = sshll.u32 %s448, 4
          %s459 = int_to_ptr.vmem [resolvable:$true] %s458
          %464 = dma.vmem_to_hbm [thread:$0]  %s459, 2048, %s457, %s445, 128, 128, 8
        $region36: #{tpu_custom_call.1} parent=27 // pred_fallthru
          _
        // Predicated region
        $region37: #{tpu_custom_call.1} parent=27 // pred_check
          %p465 = pneg %p106
        $region38: #{tpu_custom_call.1} parent=27 // pred_check_branch
          %467 = sbr.rel (%p465) target = $region40
        $region39: #{tpu_custom_call.1} parent=27 // pred_region
          %s469 = ssub.s32 16, 16
          %470 = vsyncadd [#allocation5], %s469
          %s472 = sshll.u32 [#allocation4], 4
          %s473 = int_to_ptr.vmem [resolvable:$true] %s472
          %475 = dma.vmem_to_hbm [thread:$0]  %s473, 16, %s3, [#allocation5]
        $region40: #{tpu_custom_call.1} parent=27 // pred_fallthru
          _
        // Predicated region
        $region41: #{tpu_custom_call.1} parent=27 // pred_check
          %p476 = pneg %p127
        $region42: #{tpu_custom_call.1} parent=27 // pred_check_branch
          %478 = sbr.rel (%p476) target = $region44
        $region43: #{tpu_custom_call.1} parent=27 // pred_region
          %s480 = ssub.s32 16, 16
          %481 = vsyncadd [#allocation5], %s480
          %s483 = sshll.u32 [#allocation6], 4
          %s484 = int_to_ptr.vmem [resolvable:$true] %s483
          %486 = dma.vmem_to_hbm [thread:$0]  %s484, 16, %s4, [#allocation5]
        $region44: #{tpu_custom_call.1} parent=27 // pred_fallthru
          _
        // Predicated region
        $region45: #{tpu_custom_call.1} parent=27 // pred_check
          %p487 = pneg %p106
        $region46: #{tpu_custom_call.1} parent=27 // pred_check_branch
          %489 = sbr.rel (%p487) target = $region48
        $region47: #{tpu_custom_call.1} parent=27 // pred_region
          %490 = dma.done [#allocation5], 16
        $region48: #{tpu_custom_call.1} parent=27 // pred_fallthru
          _
        // Predicated region
        $region49: #{tpu_custom_call.1} parent=27 // pred_check
          %p491 = pneg %p127
        $region50: #{tpu_custom_call.1} parent=27 // pred_check_branch
          %493 = sbr.rel (%p491) target = $region52
        $region51: #{tpu_custom_call.1} parent=27 // pred_region
          %494 = dma.done [#allocation5], 16
        $region52: #{tpu_custom_call.1} parent=27 // pred_fallthru
          _
      $region28: #{tpu_custom_call.1} parent=5 // pred_fallthru
        _
      %p495 = scmp.le.s32.totalorder 2, %s15
      // Predicated region
      $region53: #{tpu_custom_call.1} parent=5 // pred_check
        %p496 = pneg %p495
      $region54: #{tpu_custom_call.1} parent=5 // pred_check_branch
        %498 = sbr.rel (%p496) target = $region56
      $region55: #{tpu_custom_call.1} parent=5 // pred_region
        %s499 = ssub.s32 %s15, 2
        // Predicated region
        $region57: #{tpu_custom_call.1} parent=55 // pred_check
          %p500 = pneg %p91
        $region58: #{tpu_custom_call.1} parent=55 // pred_check_branch
          %502 = sbr.rel (%p500) target = $region60
        $region59: #{tpu_custom_call.1} parent=55 // pred_region
          %s503 = sand.u32 %s76, 1
          %s504 = scalar_lea.sflag [#allocation3], %s503
          %s505 = sand.u32 %s76, 1
          %s506 = smul.addr %s505, 128
          %s507 = scalar_lea.vmem [#allocation2], %s506
          %508 = dma.done %s504, 2048
        $region60: #{tpu_custom_call.1} parent=55 // pred_fallthru
          _
      $region56: #{tpu_custom_call.1} parent=5 // pred_fallthru
        _
    $region6: #{tpu_custom_call.1} parent=1 // loop_footer
      %s19 = sadd.s32 1, %s15
    $region7: #{tpu_custom_call.1} parent=1 // loop_footer_branch
      %14 = sbr.rel target = $region3
    $region8: #{tpu_custom_call.1} parent=1 // loop_exit
      _
    %509 = vsyncpa [#allocation3], 1
    %s510 = scalar_lea.sflag [#allocation3], 1
    %511 = vsyncpa %s510, 1
    %512 = vsyncpa [#allocation5], 1

</llo_original>
